<compile_context>
chip_gen: v7x
topology: tpu7x:2x2x1
jax: 0.10.0
libtpu: 0.0.40
codegen_flags: <defaults>
</compile_context>

<pallas_src>
import functools

import jax
import jax.numpy as jnp
from jax.experimental import pallas as pl
from jax.experimental.pallas import tpu as pltpu


def _round_up(n, m):
    return (n + m - 1) // m * m


def _vmem_budget_bytes():
    """Usable VMEM for pipeline buffers (~3/4 of per-core capacity)."""
    cap = 64 * 2**20                      # conservative default (v7x per-core VMEM)
    try:
        info = pltpu.get_tpu_info()
        cap = int(getattr(info, "vmem_capacity_bytes", cap) or cap)
    except Exception:
        pass
    return (cap * 3) // 4                 # ~48 MiB on v7x, ~96 MiB on v5e/v6e


# --------------------------------------------------------------------------- #
# Single-pass kernel: whole (Bt, C, HW) slab resident per grid step.
# --------------------------------------------------------------------------- #
def se_fused_kernel(x_ref, w1_ref, b1_ref, w2_ref, b2_ref, o_ref, *, inv_hw):
    # Spatial mean (pad-free: block == full (C, HW) extent).
    s = jnp.sum(x_ref[...].astype(jnp.float32), axis=-1) * inv_hw            # (Bt, C)

    # Linear(C -> hidden) + ReLU6 (f32 accumulation on the MXU).
    h = jnp.dot(s, w1_ref[...], preferred_element_type=jnp.float32) + b1_ref[...]
    h = jnp.clip(h, 0.0, 6.0)                                                # (Bt, hidden)

    # Linear(hidden -> C) + HardSigmoid.
    z = jnp.dot(h, w2_ref[...], preferred_element_type=jnp.float32) + b2_ref[...]
    g = jnp.clip(z + 3.0, 0.0, 6.0) * (1.0 / 6.0)                            # (Bt, C)

    # Re-read x from VMEM for the scale; multiply in f32, cast once at store.
    o_ref[...] = (x_ref[...].astype(jnp.float32) * g[:, :, None]).astype(o_ref.dtype)


# --------------------------------------------------------------------------- #
# Two-phase fallback (HW tiled) for stages whose (C, HW) slab overflows VMEM.
# --------------------------------------------------------------------------- #
def se_reduce_kernel(x_ref, w1_ref, b1_ref, w2_ref, b2_ref, g_ref, acc_ref,
                     *, hw, inv_hw):
    k = pl.program_id(1)

    @pl.when(k == 0)
    def _():
        acc_ref[...] = jnp.zeros_like(acc_ref)

    chunk = x_ref.shape[-1]
    xf = x_ref[...].astype(jnp.float32)                                      # (1, C, chunk)
    if hw % chunk != 0:
        # Mask the tail chunk (out-of-bounds lanes carry garbage).
        start = k * chunk
        col = jax.lax.broadcasted_iota(jnp.int32, x_ref.shape, 2)
        xf = jnp.where(start + col < hw, xf, 0.0)
    acc_ref[...] += jnp.sum(xf, axis=-1)                                     # (1, C)

    @pl.when(k == pl.num_programs(1) - 1)
    def _():
        s = acc_ref[...] * inv_hw                                            # (1, C)
        h = jnp.dot(s, w1_ref[...], preferred_element_type=jnp.float32) + b1_ref[...]
        h = jnp.clip(h, 0.0, 6.0)
        z = jnp.dot(h, w2_ref[...], preferred_element_type=jnp.float32) + b2_ref[...]
        g = jnp.clip(z + 3.0, 0.0, 6.0) * (1.0 / 6.0)                        # (1, C)
        g_ref[...] = g[:, :, None]                                           # (1, C, 1)


def se_scale_kernel(x_ref, g_ref, o_ref):
    # g_ref: (1, C, 1) f32, broadcasts over the HW chunk.
    o_ref[...] = (x_ref[...].astype(jnp.float32) * g_ref[...]).astype(o_ref.dtype)


# --------------------------------------------------------------------------- #
# Wrapper
# --------------------------------------------------------------------------- #
def se_module(x, w1, b1, w2, b2, *, block_budget_bytes=None, donate_x=False):
    """x: (B, C, H, W).  w1: (C, hidden), b1: (hidden,), w2: (hidden, C), b2: (C,).

    donate_x=True adds input_output_aliases={0: 0}; the caller must then donate
    x at the jit boundary (jax.jit(..., donate_argnums=0)) or XLA will insert a
    defensive copy.
    """
    B, C, H, W = x.shape
    hidden = w1.shape[1]
    HW = H * W

    x3 = x.reshape(B, C, HW)              # view; no pad, no extra HBM pass
    b1_2d = b1.reshape(1, hidden)
    b2_2d = b2.reshape(1, C)

    itemsize = jnp.dtype(x.dtype).itemsize
    w_bytes = sum(int(a.size) * jnp.dtype(a.dtype).itemsize
                  for a in (w1, b1_2d, w2, b2_2d))

    gen_budget = _vmem_budget_bytes()
    budget = gen_budget if block_budget_bytes is None else int(block_budget_bytes)

    per_elem = C * HW * itemsize          # one batch element of x
    # Need ~ double-buffered in + out tiles + resident weights.
    def fits(bt):
        return 4 * bt * per_elem + w_bytes <= budget

    inv_hw = 1.0 / HW

    if fits(1):
        # ------------------- single-pass, batch-blocked path -----------------
        divisors = [d for d in range(1, B + 1) if B % d == 0 and fits(d)]
        # Keep >= 2 grid steps when possible so the two v7x TensorCores both work.
        preferred = [d for d in divisors if B // d >= 2] or divisors
        Bt = max(preferred)
        need = 4 * Bt * per_elem + w_bytes
        vmem_limit = int(min(gen_budget, max(4 << 20, need + (2 << 20))))

        cost = pl.CostEstimate(
            flops=int(2 * B * C * HW + 4 * B * C * hidden),
            transcendentals=0,
            bytes_accessed=int(2 * B * C * HW * itemsize + w_bytes),
        )

        out = pl.pallas_call(
            functools.partial(se_fused_kernel, inv_hw=inv_hw),
            out_shape=jax.ShapeDtypeStruct((B, C, HW), x.dtype),
            grid=(B // Bt,),
            in_specs=[
                pl.BlockSpec((Bt, C, HW), lambda b: (b, 0, 0)),   # x, streamed
                pl.BlockSpec((C, hidden), lambda b: (0, 0)),      # weights broadcast
                pl.BlockSpec((1, hidden), lambda b: (0, 0)),
                pl.BlockSpec((hidden, C), lambda b: (0, 0)),
                pl.BlockSpec((1, C), lambda b: (0, 0)),
            ],
            out_specs=pl.BlockSpec((Bt, C, HW), lambda b: (b, 0, 0)),
            input_output_aliases=({0: 0} if donate_x else {}),
            compiler_params=pltpu.CompilerParams(
                dimension_semantics=("parallel",),
                vmem_limit_bytes=vmem_limit,
            ),
            cost_estimate=cost,
        )(x3, w1, b1_2d, w2, b2_2d)
        return out.reshape(B, C, H, W)

    # ----------------------- two-phase (HW-tiled) path -----------------------
    # Chunk = largest multiple of 128 lanes whose double-buffered in+out tiles
    # fit the budget (floor 128 so a legal tile always exists).
    avail = max(0, budget - w_bytes - (1 << 20))
    max_chunk = max(128, (avail // (4 * C * itemsize)) // 128 * 128)
    chunk = int(min(_round_up(HW, 128), max_chunk))
    n_chunks = pl.cdiv(HW, chunk)

    need = 4 * C * chunk * itemsize + w_bytes
    vmem_limit = int(min(gen_budget, max(4 << 20, need + (2 << 20))))

    # Phase 1: per-batch channel means -> SE gate g (B, C, 1) in f32.
    g = pl.pallas_call(
        functools.partial(se_reduce_kernel, hw=HW, inv_hw=inv_hw),
        out_shape=jax.ShapeDtypeStruct((B, C, 1), jnp.float32),
        grid=(B, n_chunks),
        in_specs=[
            pl.BlockSpec((1, C, chunk), lambda b, k: (b, 0, k)),
            pl.BlockSpec((C, hidden), lambda b, k: (0, 0)),
            pl.BlockSpec((1, hidden), lambda b, k: (0, 0)),
            pl.BlockSpec((hidden, C), lambda b, k: (0, 0)),
            pl.BlockSpec((1, C), lambda b, k: (0, 0)),
        ],
        out_specs=pl.BlockSpec((1, C, 1), lambda b, k: (b, 0, 0)),
        scratch_shapes=[pltpu.VMEM((1, C), jnp.float32)],
        compiler_params=pltpu.CompilerParams(
            dimension_semantics=("parallel", "arbitrary"),
            vmem_limit_bytes=vmem_limit,
        ),
        cost_estimate=pl.CostEstimate(
            flops=int(B * C * HW + 4 * B * C * hidden),
            transcendentals=0,
            bytes_accessed=int(B * C * HW * itemsize + w_bytes),
        ),
    )(x3, w1, b1_2d, w2, b2_2d)

    # Phase 2: stream x again and apply the gate.
    out = pl.pallas_call(
        se_scale_kernel,
        out_shape=jax.ShapeDtypeStruct((B, C, HW), x.dtype),
        grid=(B, n_chunks),
        in_specs=[
            pl.BlockSpec((1, C, chunk), lambda b, k: (b, 0, k)),
            pl.BlockSpec((1, C, 1), lambda b, k: (b, 0, 0)),
        ],
        out_specs=pl.BlockSpec((1, C, chunk), lambda b, k: (b, 0, k)),
        input_output_aliases=({0: 0} if donate_x else {}),
        compiler_params=pltpu.CompilerParams(
            dimension_semantics=("parallel", "parallel"),
            vmem_limit_bytes=vmem_limit,
        ),
        cost_estimate=pl.CostEstimate(
            flops=int(B * C * HW),
            transcendentals=0,
            bytes_accessed=int(2 * B * C * HW * itemsize + B * C * 4),
        ),
    )(x3, g)
    return out.reshape(B, C, H, W)


def reference(x, w1, b1, w2, b2):
    s = jnp.mean(x, axis=(2, 3))
    h = jnp.clip(s @ w1 + b1, 0.0, 6.0)
    g = jnp.clip(h @ w2 + b2 + 3.0, 0.0, 6.0) / 6.0
    return x * g[:, :, None, None]


if __name__ == "__main__":
    B, C, hidden = 2, 4, 8        # SE over in_channels = 4, bottleneck width 8

    key = jax.random.PRNGKey(0)
    kx1, kx2, kx3, k1, kb1, k2, kb2 = jax.random.split(key, 7)

    # PyTorch Linear weight is (out, in); stored pre-transposed as (in, out)
    # so the kernel uses the s @ W form.
    w1 = jax.random.normal(k1, (C, hidden), dtype=jnp.float32) * 0.1
    b1 = jax.random.normal(kb1, (hidden,), dtype=jnp.float32) * 0.1
    w2 = jax.random.normal(k2, (hidden, C), dtype=jnp.float32) * 0.1
    b2 = jax.random.normal(kb2, (C,), dtype=jnp.float32) * 0.1

    # 1) Single-pass path with aliased + donated x (in-place update).
    x1 = jax.random.normal(kx1, (B, C, 16, 16), dtype=jnp.float32)
    ref1 = reference(x1, w1, b1, w2, b2)
    jax.block_until_ready(ref1)                       # use x1 before donating it
    se_fused = jax.jit(functools.partial(se_module, donate_x=True), donate_argnums=0)
    y1 = se_fused(x1, w1, b1, w2, b2)
    jax.block_until_ready(y1)
    assert jnp.allclose(y1, ref1, atol=1e-5, rtol=1e-5), "single-pass mismatch"

    # 2) Single-pass path with HW not a multiple of 128 (no pad / no slice).
    x2 = jax.random.normal(kx2, (B, C, 10, 10), dtype=jnp.float32)
    ref2 = reference(x2, w1, b1, w2, b2)
    y2 = jax.jit(se_module)(x2, w1, b1, w2, b2)
    jax.block_until_ready(y2)
    assert jnp.allclose(y2, ref2, atol=1e-5, rtol=1e-5), "unaligned-HW mismatch"

    # 3) Two-phase (HW-tiled) fallback, forced via a tiny tile budget;
    #    HW = 144 exercises multi-chunk accumulation + masked tail chunk.
    x3 = jax.random.normal(kx3, (B, C, 12, 12), dtype=jnp.float32)
    ref3 = reference(x3, w1, b1, w2, b2)
    se_two_phase = jax.jit(functools.partial(se_module, block_budget_bytes=4096))
    y3 = se_two_phase(x3, w1, b1, w2, b2)
    jax.block_until_ready(y3)
    assert jnp.allclose(y3, ref3, atol=1e-5, rtol=1e-5), "two-phase mismatch"

    print("KERNEL_OK")
</pallas_src>

<mosaic_0001>
module attributes {stable_mosaic.version = 11 : i64} {
  func.func @se_fused_kernel(%arg0: i32, %arg1: memref<1x4x256xf32, #tpu.memory_space<vmem>>, %arg2: memref<4x8xf32, #tpu.memory_space<vmem>>, %arg3: memref<1x8xf32, #tpu.memory_space<vmem>>, %arg4: memref<8x4xf32, #tpu.memory_space<vmem>>, %arg5: memref<1x4xf32, #tpu.memory_space<vmem>>, %arg6: memref<1x4x256xf32, #tpu.memory_space<vmem>>) attributes {dimension_semantics = [#tpu.dimension_semantics<parallel>], iteration_bounds = array<i64: 2>, scalar_prefetch = 0 : i64, scratch_operands = 0 : i64, tpu.core_type = #tpu.core_type<tc>, window_params = [{transform_indices = @transform_0, window_bounds = array<i64: 1, 4, 256>}, {pipeline_mode = #tpu.pipeline_mode<synchronous>, transform_indices = @transform_1, window_bounds = array<i64: 4, 8>}, {pipeline_mode = #tpu.pipeline_mode<synchronous>, transform_indices = @transform_2, window_bounds = array<i64: 1, 8>}, {pipeline_mode = #tpu.pipeline_mode<synchronous>, transform_indices = @transform_3, window_bounds = array<i64: 8, 4>}, {pipeline_mode = #tpu.pipeline_mode<synchronous>, transform_indices = @transform_4, window_bounds = array<i64: 1, 4>}, {transform_indices = @transform_5, window_bounds = array<i64: 1, 4, 256>}]} {
    %c0 = arith.constant 0 : index
    %c0_0 = arith.constant 0 : index
    %c0_1 = arith.constant 0 : index
    %0 = vector.load %arg1[%c0, %c0_0, %c0_1] : memref<1x4x256xf32, #tpu.memory_space<vmem>>, vector<1x4x256xf32>
    %cst = arith.constant dense<0.000000e+00> : vector<1x4xf32>
    %1 = vector.multi_reduction <add>, %0, %cst [2] : vector<1x4x256xf32> to vector<1x4xf32>
    %cst_2 = arith.constant 3.906250e-03 : f32
    %2 = vector.broadcast %cst_2 : f32 to vector<1x4xf32>
    %3 = arith.mulf %1, %2 : vector<1x4xf32>
    %c0_3 = arith.constant 0 : index
    %c0_4 = arith.constant 0 : index
    %4 = vector.load %arg2[%c0_3, %c0_4] : memref<4x8xf32, #tpu.memory_space<vmem>>, vector<4x8xf32>
    %cst_5 = arith.constant dense<0.000000e+00> : vector<1x8xf32>
    %5 = tpu.matmul %3, %4, %cst_5 {dimension_numbers = #tpu.dot_dimension_numbers<[1], [0], [0], [1], [0, 0, 1, 1], [], []>} : vector<1x4xf32>, vector<4x8xf32>, vector<1x8xf32> -> vector<1x8xf32>
    %c0_6 = arith.constant 0 : index
    %c0_7 = arith.constant 0 : index
    %6 = vector.load %arg3[%c0_6, %c0_7] : memref<1x8xf32, #tpu.memory_space<vmem>>, vector<1x8xf32>
    %7 = arith.addf %5, %6 : vector<1x8xf32>
    %cst_8 = arith.constant 0.000000e+00 : f32
    %cst_9 = arith.constant 6.000000e+00 : f32
    %8 = vector.broadcast %cst_8 : f32 to vector<1x8xf32>
    %9 = arith.maximumf %8, %7 : vector<1x8xf32>
    %10 = vector.broadcast %cst_9 : f32 to vector<1x8xf32>
    %11 = arith.minimumf %10, %9 : vector<1x8xf32>
    %c0_10 = arith.constant 0 : index
    %c0_11 = arith.constant 0 : index
    %12 = vector.load %arg4[%c0_10, %c0_11] : memref<8x4xf32, #tpu.memory_space<vmem>>, vector<8x4xf32>
    %cst_12 = arith.constant dense<0.000000e+00> : vector<1x4xf32>
    %13 = tpu.matmul %11, %12, %cst_12 {dimension_numbers = #tpu.dot_dimension_numbers<[1], [0], [0], [1], [0, 0, 1, 1], [], []>} : vector<1x8xf32>, vector<8x4xf32>, vector<1x4xf32> -> vector<1x4xf32>
    %c0_13 = arith.constant 0 : index
    %c0_14 = arith.constant 0 : index
    %14 = vector.load %arg5[%c0_13, %c0_14] : memref<1x4xf32, #tpu.memory_space<vmem>>, vector<1x4xf32>
    %15 = arith.addf %13, %14 : vector<1x4xf32>
    %cst_15 = arith.constant 3.000000e+00 : f32
    %16 = vector.broadcast %cst_15 : f32 to vector<1x4xf32>
    %17 = arith.addf %15, %16 : vector<1x4xf32>
    %cst_16 = arith.constant 0.000000e+00 : f32
    %cst_17 = arith.constant 6.000000e+00 : f32
    %18 = vector.broadcast %cst_16 : f32 to vector<1x4xf32>
    %19 = arith.maximumf %18, %17 : vector<1x4xf32>
    %20 = vector.broadcast %cst_17 : f32 to vector<1x4xf32>
    %21 = arith.minimumf %20, %19 : vector<1x4xf32>
    %cst_18 = arith.constant 0.166666672 : f32
    %22 = vector.broadcast %cst_18 : f32 to vector<1x4xf32>
    %23 = arith.mulf %21, %22 : vector<1x4xf32>
    %c0_19 = arith.constant 0 : index
    %c0_20 = arith.constant 0 : index
    %c0_21 = arith.constant 0 : index
    %24 = vector.load %arg1[%c0_19, %c0_20, %c0_21] : memref<1x4x256xf32, #tpu.memory_space<vmem>>, vector<1x4x256xf32>
    %25 = vector.shape_cast %23 : vector<1x4xf32> to vector<1x4x1xf32>
    %26 = vector.broadcast %25 : vector<1x4x1xf32> to vector<1x4x256xf32>
    %27 = arith.mulf %24, %26 : vector<1x4x256xf32>
    %c0_22 = arith.constant 0 : index
    %c0_23 = arith.constant 0 : index
    %c0_24 = arith.constant 0 : index
    %28 = vector.load %arg6[%c0_22, %c0_23, %c0_24] : memref<1x4x256xf32, #tpu.memory_space<vmem>>, vector<1x4x256xf32>
    tpu.vector_store %arg6[%c0_22, %c0_23, %c0_24], %27 {strides = array<i32>} : memref<1x4x256xf32, #tpu.memory_space<vmem>>, vector<1x4x256xf32>,
    return
  }
  func.func @transform_0(%arg0: i32) -> (i32, i32, i32) {
    %c0_i32 = arith.constant 0 : i32
    %c0_i32_0 = arith.constant 0 : i32
    %c0_i32_1 = arith.constant 0 : i32
    return %arg0, %c0_i32, %c0_i32_0 : i32, i32, i32
  }
  func.func @transform_1(%arg0: i32) -> (i32, i32) {
    %c0_i32 = arith.constant 0 : i32
    %c0_i32_0 = arith.constant 0 : i32
    %c0_i32_1 = arith.constant 0 : i32
    return %c0_i32, %c0_i32_0 : i32, i32
  }
  func.func @transform_2(%arg0: i32) -> (i32, i32) {
    %c0_i32 = arith.constant 0 : i32
    %c0_i32_0 = arith.constant 0 : i32
    %c0_i32_1 = arith.constant 0 : i32
    return %c0_i32, %c0_i32_0 : i32, i32
  }
  func.func @transform_3(%arg0: i32) -> (i32, i32) {
    %c0_i32 = arith.constant 0 : i32
    %c0_i32_0 = arith.constant 0 : i32
    %c0_i32_1 = arith.constant 0 : i32
    return %c0_i32, %c0_i32_0 : i32, i32
  }
  func.func @transform_4(%arg0: i32) -> (i32, i32) {
    %c0_i32 = arith.constant 0 : i32
    %c0_i32_0 = arith.constant 0 : i32
    %c0_i32_1 = arith.constant 0 : i32
    return %c0_i32, %c0_i32_0 : i32, i32
  }
  func.func @transform_5(%arg0: i32) -> (i32, i32, i32) {
    %c0_i32 = arith.constant 0 : i32
    %c0_i32_0 = arith.constant 0 : i32
    %c0_i32_1 = arith.constant 0 : i32
    return %arg0, %c0_i32, %c0_i32_0 : i32, i32, i32
  }
}

</mosaic_0001>

<llo_original>
// kernel: se_module.1
$region0: #{se_module.1}
  #allocation0 [shape = 'u32[]', space=smem, size = 0x4, offset = 0x4, fixed_abs, tag = 'smem constant byte address 0x4 - core index']
  #allocation1 [shape = 'u32[144,128]{1,0:T(1,128)}', space=vmem, size = 0x12000, scoped, tag = 'internal scratch']
  %s0 = inlined_call_operand.vmem [shape: f32[2,4,256], index: 0, kind: input, shape index: {}, may-alias: {0,5}]
  %s1 = inlined_call_operand.vmem [shape: f32[4,8], index: 1, kind: input, shape index: {}]
  %s2 = inlined_call_operand.vmem [shape: f32[1,8], index: 2, kind: input, shape index: {}]
  %s3 = inlined_call_operand.vmem [shape: f32[8,4], index: 3, kind: input, shape index: {}]
  %s4 = inlined_call_operand.vmem [shape: f32[1,4], index: 4, kind: input, shape index: {}]
  %s5 = inlined_call_operand.vmem [shape: f32[2,4,256], index: 5, kind: output, shape index: {}, may-alias: {0,5}]
  %s6 = sld [smem:[#allocation0]]
  $region53: #{se_module.1} parent=0
    _
  %s8 = ssub.s32 1, %s6
  %s9 = scalar_select 0, %s8, %s6
  loop: start=0, step=1, limit=4
  $region2: #{se_module.1} parent=0 // loop_pre_header
    _
  $region3: #{se_module.1} parent=0 // loop_header
    %s11 = sphi 0, %s15
    %p12 = scmp.ge.s32.totalorder %s11, 4
    %s21 = sphi 0, %s23
    %s24 = sphi 0, %s21
    %s25 = sphi 0, %s24
    %s41 = sphi 0, %s25
    %s45 = sphi 0, %s45
    %s47 = sphi 0, %s45
    %s48 = sphi 0, %s47
    %s62 = sphi 0, %s48
    %s66 = sphi 0, %s66
    %s68 = sphi 0, %s66
    %s69 = sphi 0, %s68
    %s83 = sphi 0, %s69
    %s87 = sphi 0, %s87
    %s89 = sphi 0, %s87
    %s90 = sphi 0, %s89
    %s104 = sphi 0, %s90
    %s108 = sphi 0, %s108
    %s110 = sphi 0, %s108
    %s111 = sphi 0, %s110
    %s125 = sphi 0, %s111
    %s131 = sphi 0, %s133
    %s134 = sphi 0, %s131
    %s135 = sphi 0, %s134
    %s151 = sphi 0, %s135
  $region4: #{se_module.1} parent=0 // loop_header_branch
    %14 = sbr.rel (%p12) target = $region8
  $region5: #{se_module.1} parent=0 // loop_body
    %s16 = ssub.s32 %s11, 1
    %s17 = ssub.s32 %s11, 2
    %s18 = sadd.s32 %s11, 1
    %s19 = ssub.s32 %s11, %s18
    %p20 = scmp.eq.s32.totalorder %s19, 0
    %s22 = sadd.s32 %s21, 1
    %s23 = scalar_select %p20, %s21, %s22
    %p26 = pneg %p20
    %p27 = scmp.eq.s32.totalorder %s11, 1
    %p28 = por %p26, %p27
    %p29 = scmp.ne.s32.totalorder %s21, %s24
    %p30 = scmp.eq.s32.totalorder %s11, 0
    %p31 = por %p29, %p30
    %p32 = scmp.ne.s32.totalorder %s21, %s24
    %p33 = scmp.eq.s32.totalorder %s16, 1
    %p34 = por %p32, %p33
    %p35 = scmp.ne.s32.totalorder %s24, %s25
    %p36 = scmp.eq.s32.totalorder %s16, 0
    %p37 = por %p35, %p36
    %p38 = scmp.ne.s32.totalorder %s24, %s25
    %p39 = scmp.eq.s32.totalorder %s17, 1
    %p40 = por %p38, %p39
    %p42 = scmp.ne.s32.totalorder %s25, %s41
    %p43 = scmp.eq.s32.totalorder %s17, 0
    %p44 = por %p42, %p43
    %s46 = sadd.s32 %s45, 1
    %p49 = scmp.eq.s32.totalorder %s11, 1
    %p50 = scmp.ne.s32.totalorder %s45, %s47
    %p51 = scmp.eq.s32.totalorder %s11, 0
    %p52 = por %p50, %p51
    %p53 = scmp.ne.s32.totalorder %s45, %s47
    %p54 = scmp.eq.s32.totalorder %s16, 1
    %p55 = por %p53, %p54
    %p56 = scmp.ne.s32.totalorder %s47, %s48
    %p57 = scmp.eq.s32.totalorder %s16, 0
    %p58 = por %p56, %p57
    %p59 = scmp.ne.s32.totalorder %s47, %s48
    %p60 = scmp.eq.s32.totalorder %s17, 1
    %p61 = por %p59, %p60
    %p63 = scmp.ne.s32.totalorder %s48, %s62
    %p64 = scmp.eq.s32.totalorder %s17, 0
    %p65 = por %p63, %p64
    %s67 = sadd.s32 %s66, 1
    %p70 = scmp.eq.s32.totalorder %s11, 1
    %p71 = scmp.ne.s32.totalorder %s66, %s68
    %p72 = scmp.eq.s32.totalorder %s11, 0
    %p73 = por %p71, %p72
    %p74 = scmp.ne.s32.totalorder %s66, %s68
    %p75 = scmp.eq.s32.totalorder %s16, 1
    %p76 = por %p74, %p75
    %p77 = scmp.ne.s32.totalorder %s68, %s69
    %p78 = scmp.eq.s32.totalorder %s16, 0
    %p79 = por %p77, %p78
    %p80 = scmp.ne.s32.totalorder %s68, %s69
    %p81 = scmp.eq.s32.totalorder %s17, 1
    %p82 = por %p80, %p81
    %p84 = scmp.ne.s32.totalorder %s69, %s83
    %p85 = scmp.eq.s32.totalorder %s17, 0
    %p86 = por %p84, %p85
    %s88 = sadd.s32 %s87, 1
    %p91 = scmp.eq.s32.totalorder %s11, 1
    %p92 = scmp.ne.s32.totalorder %s87, %s89
    %p93 = scmp.eq.s32.totalorder %s11, 0
    %p94 = por %p92, %p93
    %p95 = scmp.ne.s32.totalorder %s87, %s89
    %p96 = scmp.eq.s32.totalorder %s16, 1
    %p97 = por %p95, %p96
    %p98 = scmp.ne.s32.totalorder %s89, %s90
    %p99 = scmp.eq.s32.totalorder %s16, 0
    %p100 = por %p98, %p99
    %p101 = scmp.ne.s32.totalorder %s89, %s90
    %p102 = scmp.eq.s32.totalorder %s17, 1
    %p103 = por %p101, %p102
    %p105 = scmp.ne.s32.totalorder %s90, %s104
    %p106 = scmp.eq.s32.totalorder %s17, 0
    %p107 = por %p105, %p106
    %s109 = sadd.s32 %s108, 1
    %p112 = scmp.eq.s32.totalorder %s11, 1
    %p113 = scmp.ne.s32.totalorder %s108, %s110
    %p114 = scmp.eq.s32.totalorder %s11, 0
    %p115 = por %p113, %p114
    %p116 = scmp.ne.s32.totalorder %s108, %s110
    %p117 = scmp.eq.s32.totalorder %s16, 1
    %p118 = por %p116, %p117
    %p119 = scmp.ne.s32.totalorder %s110, %s111
    %p120 = scmp.eq.s32.totalorder %s16, 0
    %p121 = por %p119, %p120
    %p122 = scmp.ne.s32.totalorder %s110, %s111
    %p123 = scmp.eq.s32.totalorder %s17, 1
    %p124 = por %p122, %p123
    %p126 = scmp.ne.s32.totalorder %s111, %s125
    %p127 = scmp.eq.s32.totalorder %s17, 0
    %p128 = por %p126, %p127
    %s129 = ssub.s32 %s11, %s18
    %p130 = scmp.eq.s32.totalorder %s129, 0
    %s132 = sadd.s32 %s131, 1
    %s133 = scalar_select %p130, %s131, %s132
    %p136 = pneg %p130
    %p137 = scmp.eq.s32.totalorder %s11, 1
    %p138 = por %p136, %p137
    %p139 = scmp.ne.s32.totalorder %s131, %s134
    %p140 = scmp.eq.s32.totalorder %s11, 0
    %p141 = por %p139, %p140
    %p142 = scmp.ne.s32.totalorder %s131, %s134
    %p143 = scmp.eq.s32.totalorder %s16, 1
    %p144 = por %p142, %p143
    %p145 = scmp.ne.s32.totalorder %s134, %s135
    %p146 = scmp.eq.s32.totalorder %s16, 0
    %p147 = por %p145, %p146
    %p148 = scmp.ne.s32.totalorder %s134, %s135
    %p149 = scmp.eq.s32.totalorder %s17, 1
    %p150 = por %p148, %p149
    %p152 = scmp.ne.s32.totalorder %s135, %s151
    %p153 = scmp.eq.s32.totalorder %s17, 0
    %p154 = por %p152, %p153
    %p155 = scmp.le.s32.totalorder 1, %s11
    %p156 = scmp.lt.s32.totalorder %s11, 3
    %p157 = pnand %p155, %p156
    %p158 = pneg %p157
    // Predicated region
    $region9: #{se_module.1} parent=5 // pred_check
      _
    $region10: #{se_module.1} parent=5 // pred_check_branch
      %160 = sbr.rel (%p157) target = $region12
    $region11: #{se_module.1} parent=5 // pred_region
      %s161 = ssub.s32 %s11, 1
      // Predicated region
      $region13: #{se_module.1} parent=11 // pred_check
        %p162 = pneg %p58
      $region14: #{se_module.1} parent=11 // pred_check_branch
        %164 = sbr.rel (%p162) target = $region16
      $region15: #{se_module.1} parent=11 // pred_region
        _
      $region16: #{se_module.1} parent=11 // pred_fallthru
        _
      // Predicated region
      $region17: #{se_module.1} parent=11 // pred_check
        %p165 = pneg %p79
      $region18: #{se_module.1} parent=11 // pred_check_branch
        %167 = sbr.rel (%p165) target = $region20
      $region19: #{se_module.1} parent=11 // pred_region
        _
      $region20: #{se_module.1} parent=11 // pred_fallthru
        _
      // Predicated region
      $region21: #{se_module.1} parent=11 // pred_check
        %p168 = pneg %p100
      $region22: #{se_module.1} parent=11 // pred_check_branch
        %170 = sbr.rel (%p168) target = $region24
      $region23: #{se_module.1} parent=11 // pred_region
        _
      $region24: #{se_module.1} parent=11 // pred_fallthru
        _
      // Predicated region
      $region25: #{se_module.1} parent=11 // pred_check
        %p171 = pneg %p121
      $region26: #{se_module.1} parent=11 // pred_check_branch
        %173 = sbr.rel (%p171) target = $region28
      $region27: #{se_module.1} parent=11 // pred_region
        _
      $region28: #{se_module.1} parent=11 // pred_fallthru
        _
    $region12: #{se_module.1} parent=5 // pred_fallthru
      _
    %p174 = scmp.lt.s32.totalorder %s11, 2
    // Predicated region
    $region29: #{se_module.1} parent=5 // pred_check
      %p175 = pneg %p174
    $region30: #{se_module.1} parent=5 // pred_check_branch
      %177 = sbr.rel (%p175) target = $region32
    $region31: #{se_module.1} parent=5 // pred_region
      // Predicated region
      $region33: #{se_module.1} parent=31 // pred_check
        %p178 = pneg %p31
      $region34: #{se_module.1} parent=31 // pred_check_branch
        %180 = sbr.rel (%p178) target = $region36
      $region35: #{se_module.1} parent=31 // pred_region
        %p181 = scmp.lt.s32.totalorder %s11, 1
        %s182 = scalar_select %p181, %s11, 1
        %s183 = smul.addr %s182, 2
        %s184 = smul.addr %s183, 4
        %s185 = scalar_lea.vmem %s0, %s184
      $region36: #{se_module.1} parent=31 // pred_fallthru
        _
    $region32: #{se_module.1} parent=5 // pred_fallthru
      _
    %p186 = scmp.le.s32.totalorder 1, %s11
    %p187 = scmp.lt.s32.totalorder %s11, 3
    %p188 = pnand %p186, %p187
    %p189 = pneg %p188
    // Predicated region
    $region37: #{se_module.1} parent=5 // pred_check
      _
    $region38: #{se_module.1} parent=5 // pred_check_branch
      %191 = sbr.rel (%p188) target = $region40
    $region39: #{se_module.1} parent=5 // pred_region
      %s192 = ssub.s32 %s11, 1
      %p193 = scmp.lt.s32.totalorder %s16, 1
      %s194 = scalar_select %p193, %s16, 1
      %s195 = smul.addr %s194, 2
      %s196 = smul.addr %s195, 4
      %s197 = scalar_lea.vmem %s0, %s196
      %p198 = pneg %p37
      %p199 = pneg %p34
      %p200 = pneg %p58
      %p201 = pneg %p55
      %p202 = pneg %p79
      %p203 = pneg %p76
      %p204 = pneg %p100
      %p205 = pneg %p97
      %p206 = pneg %p121
      %p207 = pneg %p118
      %p208 = pneg %p147
      %p209 = pneg %p144
      %p210 = scmp.lt.s32.totalorder %s16, 1
      %s211 = scalar_select %p210, %s16, 1
      %s212 = smul.addr %s211, 2
      %s213 = smul.addr %s212, 4
      %s214 = scalar_lea.vmem %s5, %s213
      %p215 = scmp.lt.s32.totalorder %s16, 1
      %s216 = scalar_select %p215, %s16, 1
      %s217 = smul.addr %s216, 2
      %s218 = smul.addr %s217, 4
      %s219 = scalar_lea.vmem %s0, %s218
      %p220 = scmp.lt.s32.totalorder %s16, 1
      %s221 = scalar_select %p220, %s16, 1
      %s222 = smul.addr %s221, 2
      %s223 = smul.addr %s222, 4
      %s224 = scalar_lea.vmem %s5, %s223
      %v225 = vld [vmem:[%s219] sm:$0xff]
      %v227 = vcombine.high %v225, %v225
      %vm229 = vcmask 1043456
      %v230 = vsel %vm229, %v225, 0.0
      %v231 = vsel %vm229, %v227, 0.0
      %v232 = vadd.f32 %v230, %v231
      %233 = vadd.xlane.f32.xlu0 %v232
      %v234 = vpop.xlane.xlu0 %233
      %v235 = vmul.f32 %v234, 0.00390625
      %v236 = vld [vmem:[%s1] sm:$0xf]
      %v237 = vld [vmem:[%s2] sm:$0x1]
      %v239 = vlaneseq
      %v240 = vand.u32 %v239, 127
      %v241 = vlaneseq
      %v242 = vshrl.u32 %v241, 7
      %v243 = vsub.s32 %v240, %v242
      %v244 = vrot.slane %v235, %v243
      %vm245 = vcmask 31744
      %v246 = vsel %vm245, %v244, 0
      %v249 = vsel %vm229, %v236, 0
      %251 = vmatprep.subr.mxu0 0.0
      %252 = vmatpush1.msra.mxu0 %v249
      %253 = vmatprep.subr.mxu0 0.0
      %254 = vmatpush1.msra.mxu0 0.0
      %255 = vmatprep.subr.mxu0 0.0
      %256 = vmatpush1.msra.mxu0 0.0
      %257 = vmatprep.subr.mxu0 0.0
      %258 = vmatpush1.msra.mxu0 0.0
      %259 = vmatprep.subr.mxu0 0.0
      %260 = vmatpush1.msra.mxu0 0.0
      %261 = vmatprep.subr.mxu0 0.0
      %262 = vmatpush1.msra.mxu0 0.0
      %263 = vmatprep.subr.mxu0 0.0
      %264 = vmatpush1.msra.mxu0 0.0
      %265 = vmatprep.subr.mxu0 0.0
      %266 = vmatpush1.msra.mxu0 0.0
      %267 = vmatprep.subr.mxu0 0.0
      %268 = vmatpush1.msra.mxu0 0.0
      %269 = vmatprep.subr.mxu0 0.0
      %270 = vmatpush1.msra.mxu0 0.0
      %271 = vmatprep.subr.mxu0 0.0
      %272 = vmatpush1.msra.mxu0 0.0
      %273 = vmatprep.subr.mxu0 0.0
      %274 = vmatpush1.msra.mxu0 0.0
      %275 = vmatprep.subr.mxu0 0.0
      %276 = vmatpush1.msra.mxu0 0.0
      %277 = vmatprep.subr.mxu0 0.0
      %278 = vmatpush1.msra.mxu0 0.0
      %279 = vmatprep.subr.mxu0 0.0
      %280 = vmatpush1.msra.mxu0 0.0
      %281 = vmatprep.subr.mxu0 0.0
      %282 = vmatpush1.msra.mxu0 0.0
      %283 = vmatprep.subr.mxu0 0.0
      %284 = vmatpush1.msra.mxu0 0.0
      %285 = vmatprep.subr.mxu0 0.0
      %286 = vmatpush1.msra.mxu0 0.0
      %287 = vmatprep.subr.mxu0 0.0
      %288 = vmatpush1.msra.mxu0 0.0
      %289 = vmatprep.subr.mxu0 0.0
      %290 = vmatpush1.msra.mxu0 0.0
      %291 = vmatprep.subr.mxu0 0.0
      %292 = vmatpush1.msra.mxu0 0.0
      %293 = vmatprep.subr.mxu0 0.0
      %294 = vmatpush1.msra.mxu0 0.0
      %295 = vmatprep.subr.mxu0 0.0
      %296 = vmatpush1.msra.mxu0 0.0
      %297 = vmatprep.subr.mxu0 0.0
      %298 = vmatpush1.msra.mxu0 0.0
      %299 = vmatprep.subr.mxu0 0.0
      %300 = vmatpush1.msra.mxu0 0.0
      %301 = vmatprep.subr.mxu0 0.0
      %302 = vmatpush1.msra.mxu0 0.0
      %303 = vmatprep.subr.mxu0 0.0
      %304 = vmatpush1.msra.mxu0 0.0
      %305 = vmatprep.subr.mxu0 0.0
      %306 = vmatpush1.msra.mxu0 0.0
      %307 = vmatprep.subr.mxu0 0.0
      %308 = vmatpush1.msra.mxu0 0.0
      %309 = vmatprep.subr.mxu0 0.0
      %310 = vmatpush1.msra.mxu0 0.0
      %311 = vmatprep.subr.mxu0 0.0
      %312 = vmatpush1.msra.mxu0 0.0
      %313 = vmatprep.subr.mxu0 0.0
      %314 = vmatpush1.msra.mxu0 0.0
      %315 = vmatprep.mubr.f32.mxu0 0.0
      %316 = vmatmul.mubr.f32.gmra.mrb[0].mxu0 %v246
      %v317 = vpop.f32.mrb[0].mxu0
      %v318 = vadd.f32 %v237, %v317
      %v319 = vpop.f32.mrb[0].mxu0
      %320 = vdwg.mxu0
      %v321 = vmax.f32 %v318, 0.0
      %v322 = vmin.f32 %v321, 6.0
      %v323 = vld [vmem:[%s3] sm:$0xff]
      %v324 = vld [vmem:[%s4] sm:$0x1]
      %vm325 = vcmask 64512
      %v327 = vsel %vm325, %v322, 0
      %329 = vmatprep.subr.mxu0 0.0
      %330 = vmatpush1.msra.mxu0 %v323
      %331 = vmatprep.subr.mxu0 0.0
      %332 = vmatpush1.msra.mxu0 0.0
      %333 = vmatprep.subr.mxu0 0.0
      %334 = vmatpush1.msra.mxu0 0.0
      %335 = vmatprep.subr.mxu0 0.0
      %336 = vmatpush1.msra.mxu0 0.0
      %337 = vmatprep.subr.mxu0 0.0
      %338 = vmatpush1.msra.mxu0 0.0
      %339 = vmatprep.subr.mxu0 0.0
      %340 = vmatpush1.msra.mxu0 0.0
      %341 = vmatprep.subr.mxu0 0.0
      %342 = vmatpush1.msra.mxu0 0.0
      %343 = vmatprep.subr.mxu0 0.0
      %344 = vmatpush1.msra.mxu0 0.0
      %345 = vmatprep.subr.mxu0 0.0
      %346 = vmatpush1.msra.mxu0 0.0
      %347 = vmatprep.subr.mxu0 0.0
      %348 = vmatpush1.msra.mxu0 0.0
      %349 = vmatprep.subr.mxu0 0.0
      %350 = vmatpush1.msra.mxu0 0.0
      %351 = vmatprep.subr.mxu0 0.0
      %352 = vmatpush1.msra.mxu0 0.0
      %353 = vmatprep.subr.mxu0 0.0
      %354 = vmatpush1.msra.mxu0 0.0
      %355 = vmatprep.subr.mxu0 0.0
      %356 = vmatpush1.msra.mxu0 0.0
      %357 = vmatprep.subr.mxu0 0.0
      %358 = vmatpush1.msra.mxu0 0.0
      %359 = vmatprep.subr.mxu0 0.0
      %360 = vmatpush1.msra.mxu0 0.0
      %361 = vmatprep.subr.mxu0 0.0
      %362 = vmatpush1.msra.mxu0 0.0
      %363 = vmatprep.subr.mxu0 0.0
      %364 = vmatpush1.msra.mxu0 0.0
      %365 = vmatprep.subr.mxu0 0.0
      %366 = vmatpush1.msra.mxu0 0.0
      %367 = vmatprep.subr.mxu0 0.0
      %368 = vmatpush1.msra.mxu0 0.0
      %369 = vmatprep.subr.mxu0 0.0
      %370 = vmatpush1.msra.mxu0 0.0
      %371 = vmatprep.subr.mxu0 0.0
      %372 = vmatpush1.msra.mxu0 0.0
      %373 = vmatprep.subr.mxu0 0.0
      %374 = vmatpush1.msra.mxu0 0.0
      %375 = vmatprep.subr.mxu0 0.0
      %376 = vmatpush1.msra.mxu0 0.0
      %377 = vmatprep.subr.mxu0 0.0
      %378 = vmatpush1.msra.mxu0 0.0
      %379 = vmatprep.subr.mxu0 0.0
      %380 = vmatpush1.msra.mxu0 0.0
      %381 = vmatprep.subr.mxu0 0.0
      %382 = vmatpush1.msra.mxu0 0.0
      %383 = vmatprep.subr.mxu0 0.0
      %384 = vmatpush1.msra.mxu0 0.0
      %385 = vmatprep.subr.mxu0 0.0
      %386 = vmatpush1.msra.mxu0 0.0
      %387 = vmatprep.subr.mxu0 0.0
      %388 = vmatpush1.msra.mxu0 0.0
      %389 = vmatprep.subr.mxu0 0.0
      %390 = vmatpush1.msra.mxu0 0.0
      %391 = vmatprep.subr.mxu0 0.0
      %392 = vmatpush1.msra.mxu0 0.0
      %393 = vmatprep.mubr.f32.mxu0 0.0
      %394 = vmatmul.mubr.f32.gmra.mrb[0].mxu0 %v327
      %v395 = vpop.f32.mrb[0].mxu0
      %v396 = vadd.f32 %v324, %v395
      %v397 = vpop.f32.mrb[0].mxu0
      %398 = vdwg.mxu0
      %v399 = vadd.f32 %v396, 3.0
      %v400 = vmax.f32 %v399, 0.0
      %v401 = vmin.f32 %v400, 6.0
      %v402 = vmul.f32 %v401, 0.16666667
      %v403 = vlaneseq
      %v404 = vshrl.u32 %v403, 7
      %v405 = vsub.s32 0, %v404
      %v406 = vrot.slane %v402, %v405
      %408 = vbcast.lane.b32.xlu0 %v406, 256
      %v409 = vpop.permute.xlu0 %408
      %v412 = vunpack.c.l.s4 839922192
      %v413 = vunpack.c.0.s8 %v412
      %v414 = vlaneseq
      %v415 = vshrl.u32 %v414, 7
      %v416 = vsub.s32 %v413, %v415
      %v417 = vrot.slane %v409, %v416
      %v419 = vmul.f32 %v225, %v417
      %420 = vst [vmem:[%s224] sm:$0xff] %v419
      %p421 = scmp.lt.s32.totalorder %s16, 1
      %s422 = scalar_select %p421, %s16, 1
      %s423 = smul.addr %s422, 2
      %s424 = smul.addr %s423, 4
      %s425 = scalar_lea.vmem %s5, %s424
      // Predicated region
      $region41: #{se_module.1} parent=39 // pred_check
        %p426 = pneg %p144
      $region42: #{se_module.1} parent=39 // pred_check_branch
        %428 = sbr.rel (%p426) target = $region44
      $region43: #{se_module.1} parent=39 // pred_region
        _
      $region44: #{se_module.1} parent=39 // pred_fallthru
        _
    $region40: #{se_module.1} parent=5 // pred_fallthru
      _
    %p429 = scmp.le.s32.totalorder 2, %s11
    // Predicated region
    $region45: #{se_module.1} parent=5 // pred_check
      %p430 = pneg %p429
    $region46: #{se_module.1} parent=5 // pred_check_branch
      %432 = sbr.rel (%p430) target = $region48
    $region47: #{se_module.1} parent=5 // pred_region
      %s433 = ssub.s32 %s11, 2
      // Predicated region
      $region49: #{se_module.1} parent=47 // pred_check
        %p434 = pneg %p150
      $region50: #{se_module.1} parent=47 // pred_check_branch
        %436 = sbr.rel (%p434) target = $region52
      $region51: #{se_module.1} parent=47 // pred_region
        %p437 = scmp.lt.s32.totalorder %s17, 1
        %s438 = scalar_select %p437, %s17, 1
        %s439 = smul.addr %s438, 2
        %s440 = smul.addr %s439, 4
        %s441 = scalar_lea.vmem %s5, %s440
      $region52: #{se_module.1} parent=47 // pred_fallthru
        _
    $region48: #{se_module.1} parent=5 // pred_fallthru
      _
  $region6: #{se_module.1} parent=0 // loop_footer
    %s15 = sadd.s32 1, %s11
  $region7: #{se_module.1} parent=0 // loop_footer_branch
    %10 = sbr.rel target = $region3
  $region8: #{se_module.1} parent=0 // loop_exit
    _

</llo_original>
